<compile_context>
chip_gen: v6e
topology: v6e:2x2x1
jax: 0.10.0
libtpu: 0.0.40
codegen_flags: <defaults>
</compile_context>

<pallas_src>
import jax
import jax.numpy as jnp
from jax import lax
from jax.experimental import pallas as pl
from jax.experimental.pallas import tpu as pltpu

_LANE = 128
_MIB = 1024 * 1024


def _sublane_granularity(dtype) -> int:
    """Minimum legal second-minor tile size for this dtype."""
    itemsize = jnp.dtype(dtype).itemsize
    if itemsize >= 4:
        return 8
    if itemsize == 2:
        return 16
    return 32


def _round_up(x, m):
    return ((x + m - 1) // m) * m


def _vmem_budgets():
    """(live-buffer budget, requested scoped limit, physical capacity)."""
    try:
        cap = int(pltpu.get_tpu_info().vmem_capacity_bytes)
    except Exception:
        cap = 64 * _MIB  # conservative: v7x has the smallest VMEM per TC
    live_budget = min(48 * _MIB, (cap * 3) // 8)   # v7x -> 24 MiB, v5e/v6e -> 48 MiB
    limit = min(96 * _MIB, (cap * 3) // 4)         # v7x -> 48 MiB, v5e/v6e -> 96 MiB
    return live_budget, limit, cap


def _pick_q_tile(q_pad, d_pad, K, itemsize, budget, gran, min_blocks, batch):
    """Largest aligned divisor of q_pad whose double-buffered in+out footprint
    fits `budget`, then capped so the grid has >= min_blocks blocks when Q
    allows (so v7x's 2 TensorCores both get work)."""
    divisors = [q for q in range(gran, q_pad + 1, gran) if q_pad % q == 0]

    def live_bytes(qt):
        # double-buffered [input tile + K output planes]
        return 2 * (1 + K) * qt * d_pad * itemsize

    fitting = [q for q in divisors if live_bytes(q) <= budget]
    # Fallback: smallest legal tile; the scoped VMEM limit is raised to match.
    qt = max(fitting) if fitting else min(divisors)

    capped = [q for q in divisors
              if q <= qt and batch * (q_pad // q) >= min_blocks]
    if capped:
        qt = max(capped)
    return qt, live_bytes(qt)


def _pick_subtile(q_tile, d_pad, itemsize, gran):
    """Largest aligned divisor of q_tile whose data footprint is <= ~32 vregs
    (128 KiB), so the subtile stays in registers across the unrolled K loop."""
    max_rows = max(gran, (32 * 4096) // (d_pad * itemsize))
    sub = gran
    for cand in range(gran, q_tile + 1, gran):
        if q_tile % cand == 0 and cand <= max_rows:
            sub = cand
    return sub


def _make_rbf_bank_kernel(K, q_tile, sub):
    n_sub = q_tile // sub

    def kernel(mu_ref, gamma_ref, data_ref, out_ref):
        # data block: (1, q_tile, D); out block: (1, K, q_tile, D)
        def sub_body(s, carry):
            row = pl.multiple_of(s * sub, sub)
            # <= ~32 vregs: genuinely resident across all K iterations.
            x = data_ref[0, pl.ds(row, sub), :]

            def k_body(k, c):
                adj = x - mu_ref[k]                       # SMEM scalar broadcast
                # exactly sub, mul, mul on the VPU + one exp on the EUP
                val = jnp.exp(adj * adj * gamma_ref[k])
                out_ref[0, k, pl.ds(row, sub), :] = val.astype(out_ref.dtype)
                return c

            # Fully unrolled: static per-k schedule visible to the LLO scheduler.
            lax.fori_loop(0, K, k_body, 0, unroll=True)
            return carry

        lax.fori_loop(0, n_sub, sub_body, 0, unroll=(n_sub <= 2))

    return kernel


def knrm_rbf_kernel_bank(data, mus, sigmas):
    """data: [B, Q, D]; mus, sigmas: [K]  ->  [B, K, Q, D] (dtype of data)."""
    B, Q, D = data.shape
    K = mus.shape[0]
    dtype = data.dtype
    itemsize = jnp.dtype(dtype).itemsize
    gran = _sublane_granularity(dtype)

    # Hoist the coefficient out of the per-element path (32-bit SMEM scalars).
    mus_s = mus.astype(jnp.float32)
    gammas_s = (-0.5 / (sigmas.astype(jnp.float32) ** 2)).astype(jnp.float32)

    # Pad Q to the sublane granularity and D to lane width so every store is
    # an unmasked, lane-dense vst; padding is sliced off at the end.
    q_pad = _round_up(Q, gran)
    d_pad = _round_up(D, _LANE)
    if (q_pad, d_pad) != (Q, D):
        data = jnp.pad(data, ((0, 0), (0, q_pad - Q), (0, d_pad - D)))

    budget, vmem_limit, vmem_cap = _vmem_budgets()
    q_tile, live_bytes = _pick_q_tile(
        q_pad, d_pad, K, itemsize, budget, gran, min_blocks=4, batch=B)
    # If even the smallest legal tile exceeds the budget, raise the scoped
    # limit (clamped to physical VMEM) instead of failing to compile.
    vmem_limit = int(min(vmem_cap, max(vmem_limit, live_bytes + 2 * _MIB)))

    sub = _pick_subtile(q_tile, d_pad, itemsize, gran)
    grid = (B, q_pad // q_tile)

    kernel = _make_rbf_bank_kernel(K, q_tile, sub)

    cost = pl.CostEstimate(
        flops=3 * B * K * q_pad * d_pad,
        transcendentals=B * K * q_pad * d_pad,
        bytes_accessed=(1 + K) * B * q_pad * d_pad * itemsize,
    )

    out = pl.pallas_call(
        kernel,
        out_shape=jax.ShapeDtypeStruct((B, K, q_pad, d_pad), dtype),
        grid=grid,
        in_specs=[
            pl.BlockSpec(memory_space=pltpu.MemorySpace.SMEM),           # mus
            pl.BlockSpec(memory_space=pltpu.MemorySpace.SMEM),           # gammas
            pl.BlockSpec((1, q_tile, d_pad), lambda b, q: (b, q, 0)),    # data
        ],
        out_specs=pl.BlockSpec((1, K, q_tile, d_pad), lambda b, q: (b, 0, q, 0)),
        compiler_params=pltpu.CompilerParams(
            # Both axes are data-independent. "parallel" is near-neutral on
            # 1-TC parts and lets v7x shard the (>=4-block) grid across cores.
            dimension_semantics=("parallel", "parallel"),
            vmem_limit_bytes=vmem_limit,
        ),
        cost_estimate=cost,
    )(mus_s, gammas_s, data)

    if (q_pad, d_pad) != (Q, D):
        out = out[:, :, :Q, :D]
    return out


def reference(data, mus, sigmas):
    # Pure-JAX reference matching the PyTorch module exactly.
    mu = mus[None, :, None, None]
    sg = sigmas[None, :, None, None]
    adj = data[:, None, :, :] - mu
    return jnp.exp(-0.5 * adj * adj / sg / sg)


if __name__ == "__main__":
    # Standard KNRM bank: 11 RBF kernels.
    mus = jnp.array(
        [-0.9, -0.7, -0.5, -0.3, -0.1, 0.1, 0.3, 0.5, 0.7, 0.9, 1.0],
        dtype=jnp.float32)
    sigmas = jnp.array(
        [0.1, 0.1, 0.1, 0.1, 0.1, 0.1, 0.1, 0.1, 0.1, 0.1, 0.001],
        dtype=jnp.float32)

    # Small example similarity matrix [batch=2, qlen=8, dlen=128] in [-1, 1].
    key = jax.random.PRNGKey(0)
    data = jax.random.uniform(
        key, (2, 8, 128), dtype=jnp.float32, minval=-1.0, maxval=1.0)

    out = knrm_rbf_kernel_bank(data, mus, sigmas)
    out = jax.block_until_ready(out)

    ref = reference(data, mus, sigmas)
    assert out.shape == (2, 11, 8, 128), out.shape
    assert jnp.allclose(out, ref, atol=1e-6, rtol=1e-5), "mismatch vs reference"

    print("KERNEL_OK")
</pallas_src>

<mosaic_0001>
module attributes {stable_mosaic.version = 11 : i64} {
  func.func @kernel(%arg0: i32, %arg1: i32, %arg2: memref<11xf32, #tpu.memory_space<smem>>, %arg3: memref<11xf32, #tpu.memory_space<smem>>, %arg4: memref<1x8x128xf32, #tpu.memory_space<vmem>>, %arg5: memref<1x11x8x128xf32, #tpu.memory_space<vmem>>) attributes {dimension_semantics = [#tpu.dimension_semantics<parallel>, #tpu.dimension_semantics<parallel>], iteration_bounds = array<i64: 2, 1>, scalar_prefetch = 0 : i64, scratch_operands = 0 : i64, tpu.core_type = #tpu.core_type<tc>, window_params = [{transform_indices = @transform_0, window_bounds = array<i64: 11>}, {transform_indices = @transform_1, window_bounds = array<i64: 11>}, {transform_indices = @transform_2, window_bounds = array<i64: 1, 8, 128>}, {transform_indices = @transform_3, window_bounds = array<i64: 1, 11, 8, 128>}]} {
    %c0_i32 = arith.constant 0 : i32
    %c8_i32 = arith.constant 8 : i32
    %0 = arith.muli %c0_i32, %c8_i32 : i32
    %1 = tpu.assume_multiple %0, 8 : i32
    %c0 = arith.constant 0 : index
    %2 = arith.index_cast %1 : i32 to index
    %c0_0 = arith.constant 0 : index
    %3 = vector.load %arg4[%c0, %2, %c0_0] : memref<1x8x128xf32, #tpu.memory_space<vmem>>, vector<1x8x128xf32>
    %4 = vector.shape_cast %3 : vector<1x8x128xf32> to vector<8x128xf32>
    %c0_i32_1 = arith.constant 0 : i32
    %5 = arith.index_cast %c0_i32_1 : i32 to index
    %6 = memref.load %arg2[%5] : memref<11xf32, #tpu.memory_space<smem>>
    %7 = vector.broadcast %6 : f32 to vector<8x128xf32>
    %8 = arith.subf %4, %7 : vector<8x128xf32>
    %9 = arith.mulf %8, %8 : vector<8x128xf32>
    %10 = arith.index_cast %c0_i32_1 : i32 to index
    %11 = memref.load %arg3[%10] : memref<11xf32, #tpu.memory_space<smem>>
    %12 = vector.broadcast %11 : f32 to vector<8x128xf32>
    %13 = arith.mulf %9, %12 : vector<8x128xf32>
    %14 = math.exp %13 : vector<8x128xf32>
    %c0_2 = arith.constant 0 : index
    %15 = arith.index_cast %c0_i32_1 : i32 to index
    %16 = arith.index_cast %1 : i32 to index
    %c0_3 = arith.constant 0 : index
    %17 = vector.load %arg5[%c0_2, %15, %16, %c0_3] : memref<1x11x8x128xf32, #tpu.memory_space<vmem>>, vector<1x1x8x128xf32>
    %18 = vector.shape_cast %17 : vector<1x1x8x128xf32> to vector<8x128xf32>
    %19 = vector.shape_cast %14 : vector<8x128xf32> to vector<1x1x8x128xf32>
    tpu.vector_store %arg5[%c0_2, %15, %16, %c0_3], %19 {strides = array<i32>} : memref<1x11x8x128xf32, #tpu.memory_space<vmem>>, vector<1x1x8x128xf32>,
    %c1_i32 = arith.constant 1 : i32
    %20 = arith.index_cast %c1_i32 : i32 to index
    %21 = memref.load %arg2[%20] : memref<11xf32, #tpu.memory_space<smem>>
    %22 = vector.broadcast %21 : f32 to vector<8x128xf32>
    %23 = arith.subf %4, %22 : vector<8x128xf32>
    %24 = arith.mulf %23, %23 : vector<8x128xf32>
    %25 = arith.index_cast %c1_i32 : i32 to index
    %26 = memref.load %arg3[%25] : memref<11xf32, #tpu.memory_space<smem>>
    %27 = vector.broadcast %26 : f32 to vector<8x128xf32>
    %28 = arith.mulf %24, %27 : vector<8x128xf32>
    %29 = math.exp %28 : vector<8x128xf32>
    %c0_4 = arith.constant 0 : index
    %30 = arith.index_cast %c1_i32 : i32 to index
    %31 = arith.index_cast %1 : i32 to index
    %c0_5 = arith.constant 0 : index
    %32 = vector.load %arg5[%c0_4, %30, %31, %c0_5] : memref<1x11x8x128xf32, #tpu.memory_space<vmem>>, vector<1x1x8x128xf32>
    %33 = vector.shape_cast %32 : vector<1x1x8x128xf32> to vector<8x128xf32>
    %34 = vector.shape_cast %29 : vector<8x128xf32> to vector<1x1x8x128xf32>
    tpu.vector_store %arg5[%c0_4, %30, %31, %c0_5], %34 {strides = array<i32>} : memref<1x11x8x128xf32, #tpu.memory_space<vmem>>, vector<1x1x8x128xf32>,
    %c2_i32 = arith.constant 2 : i32
    %35 = arith.index_cast %c2_i32 : i32 to index
    %36 = memref.load %arg2[%35] : memref<11xf32, #tpu.memory_space<smem>>
    %37 = vector.broadcast %36 : f32 to vector<8x128xf32>
    %38 = arith.subf %4, %37 : vector<8x128xf32>
    %39 = arith.mulf %38, %38 : vector<8x128xf32>
    %40 = arith.index_cast %c2_i32 : i32 to index
    %41 = memref.load %arg3[%40] : memref<11xf32, #tpu.memory_space<smem>>
    %42 = vector.broadcast %41 : f32 to vector<8x128xf32>
    %43 = arith.mulf %39, %42 : vector<8x128xf32>
    %44 = math.exp %43 : vector<8x128xf32>
    %c0_6 = arith.constant 0 : index
    %45 = arith.index_cast %c2_i32 : i32 to index
    %46 = arith.index_cast %1 : i32 to index
    %c0_7 = arith.constant 0 : index
    %47 = vector.load %arg5[%c0_6, %45, %46, %c0_7] : memref<1x11x8x128xf32, #tpu.memory_space<vmem>>, vector<1x1x8x128xf32>
    %48 = vector.shape_cast %47 : vector<1x1x8x128xf32> to vector<8x128xf32>
    %49 = vector.shape_cast %44 : vector<8x128xf32> to vector<1x1x8x128xf32>
    tpu.vector_store %arg5[%c0_6, %45, %46, %c0_7], %49 {strides = array<i32>} : memref<1x11x8x128xf32, #tpu.memory_space<vmem>>, vector<1x1x8x128xf32>,
    %c3_i32 = arith.constant 3 : i32
    %50 = arith.index_cast %c3_i32 : i32 to index
    %51 = memref.load %arg2[%50] : memref<11xf32, #tpu.memory_space<smem>>
    %52 = vector.broadcast %51 : f32 to vector<8x128xf32>
    %53 = arith.subf %4, %52 : vector<8x128xf32>
    %54 = arith.mulf %53, %53 : vector<8x128xf32>
    %55 = arith.index_cast %c3_i32 : i32 to index
    %56 = memref.load %arg3[%55] : memref<11xf32, #tpu.memory_space<smem>>
    %57 = vector.broadcast %56 : f32 to vector<8x128xf32>
    %58 = arith.mulf %54, %57 : vector<8x128xf32>
    %59 = math.exp %58 : vector<8x128xf32>
    %c0_8 = arith.constant 0 : index
    %60 = arith.index_cast %c3_i32 : i32 to index
    %61 = arith.index_cast %1 : i32 to index
    %c0_9 = arith.constant 0 : index
    %62 = vector.load %arg5[%c0_8, %60, %61, %c0_9] : memref<1x11x8x128xf32, #tpu.memory_space<vmem>>, vector<1x1x8x128xf32>
    %63 = vector.shape_cast %62 : vector<1x1x8x128xf32> to vector<8x128xf32>
    %64 = vector.shape_cast %59 : vector<8x128xf32> to vector<1x1x8x128xf32>
    tpu.vector_store %arg5[%c0_8, %60, %61, %c0_9], %64 {strides = array<i32>} : memref<1x11x8x128xf32, #tpu.memory_space<vmem>>, vector<1x1x8x128xf32>,
    %c4_i32 = arith.constant 4 : i32
    %65 = arith.index_cast %c4_i32 : i32 to index
    %66 = memref.load %arg2[%65] : memref<11xf32, #tpu.memory_space<smem>>
    %67 = vector.broadcast %66 : f32 to vector<8x128xf32>
    %68 = arith.subf %4, %67 : vector<8x128xf32>
    %69 = arith.mulf %68, %68 : vector<8x128xf32>
    %70 = arith.index_cast %c4_i32 : i32 to index
    %71 = memref.load %arg3[%70] : memref<11xf32, #tpu.memory_space<smem>>
    %72 = vector.broadcast %71 : f32 to vector<8x128xf32>
    %73 = arith.mulf %69, %72 : vector<8x128xf32>
    %74 = math.exp %73 : vector<8x128xf32>
    %c0_10 = arith.constant 0 : index
    %75 = arith.index_cast %c4_i32 : i32 to index
    %76 = arith.index_cast %1 : i32 to index
    %c0_11 = arith.constant 0 : index
    %77 = vector.load %arg5[%c0_10, %75, %76, %c0_11] : memref<1x11x8x128xf32, #tpu.memory_space<vmem>>, vector<1x1x8x128xf32>
    %78 = vector.shape_cast %77 : vector<1x1x8x128xf32> to vector<8x128xf32>
    %79 = vector.shape_cast %74 : vector<8x128xf32> to vector<1x1x8x128xf32>
    tpu.vector_store %arg5[%c0_10, %75, %76, %c0_11], %79 {strides = array<i32>} : memref<1x11x8x128xf32, #tpu.memory_space<vmem>>, vector<1x1x8x128xf32>,
    %c5_i32 = arith.constant 5 : i32
    %80 = arith.index_cast %c5_i32 : i32 to index
    %81 = memref.load %arg2[%80] : memref<11xf32, #tpu.memory_space<smem>>
    %82 = vector.broadcast %81 : f32 to vector<8x128xf32>
    %83 = arith.subf %4, %82 : vector<8x128xf32>
    %84 = arith.mulf %83, %83 : vector<8x128xf32>
    %85 = arith.index_cast %c5_i32 : i32 to index
    %86 = memref.load %arg3[%85] : memref<11xf32, #tpu.memory_space<smem>>
    %87 = vector.broadcast %86 : f32 to vector<8x128xf32>
    %88 = arith.mulf %84, %87 : vector<8x128xf32>
    %89 = math.exp %88 : vector<8x128xf32>
    %c0_12 = arith.constant 0 : index
    %90 = arith.index_cast %c5_i32 : i32 to index
    %91 = arith.index_cast %1 : i32 to index
    %c0_13 = arith.constant 0 : index
    %92 = vector.load %arg5[%c0_12, %90, %91, %c0_13] : memref<1x11x8x128xf32, #tpu.memory_space<vmem>>, vector<1x1x8x128xf32>
    %93 = vector.shape_cast %92 : vector<1x1x8x128xf32> to vector<8x128xf32>
    %94 = vector.shape_cast %89 : vector<8x128xf32> to vector<1x1x8x128xf32>
    tpu.vector_store %arg5[%c0_12, %90, %91, %c0_13], %94 {strides = array<i32>} : memref<1x11x8x128xf32, #tpu.memory_space<vmem>>, vector<1x1x8x128xf32>,
    %c6_i32 = arith.constant 6 : i32
    %95 = arith.index_cast %c6_i32 : i32 to index
    %96 = memref.load %arg2[%95] : memref<11xf32, #tpu.memory_space<smem>>
    %97 = vector.broadcast %96 : f32 to vector<8x128xf32>
    %98 = arith.subf %4, %97 : vector<8x128xf32>
    %99 = arith.mulf %98, %98 : vector<8x128xf32>
    %100 = arith.index_cast %c6_i32 : i32 to index
    %101 = memref.load %arg3[%100] : memref<11xf32, #tpu.memory_space<smem>>
    %102 = vector.broadcast %101 : f32 to vector<8x128xf32>
    %103 = arith.mulf %99, %102 : vector<8x128xf32>
    %104 = math.exp %103 : vector<8x128xf32>
    %c0_14 = arith.constant 0 : index
    %105 = arith.index_cast %c6_i32 : i32 to index
    %106 = arith.index_cast %1 : i32 to index
    %c0_15 = arith.constant 0 : index
    %107 = vector.load %arg5[%c0_14, %105, %106, %c0_15] : memref<1x11x8x128xf32, #tpu.memory_space<vmem>>, vector<1x1x8x128xf32>
    %108 = vector.shape_cast %107 : vector<1x1x8x128xf32> to vector<8x128xf32>
    %109 = vector.shape_cast %104 : vector<8x128xf32> to vector<1x1x8x128xf32>
    tpu.vector_store %arg5[%c0_14, %105, %106, %c0_15], %109 {strides = array<i32>} : memref<1x11x8x128xf32, #tpu.memory_space<vmem>>, vector<1x1x8x128xf32>,
    %c7_i32 = arith.constant 7 : i32
    %110 = arith.index_cast %c7_i32 : i32 to index
    %111 = memref.load %arg2[%110] : memref<11xf32, #tpu.memory_space<smem>>
    %112 = vector.broadcast %111 : f32 to vector<8x128xf32>
    %113 = arith.subf %4, %112 : vector<8x128xf32>
    %114 = arith.mulf %113, %113 : vector<8x128xf32>
    %115 = arith.index_cast %c7_i32 : i32 to index
    %116 = memref.load %arg3[%115] : memref<11xf32, #tpu.memory_space<smem>>
    %117 = vector.broadcast %116 : f32 to vector<8x128xf32>
    %118 = arith.mulf %114, %117 : vector<8x128xf32>
    %119 = math.exp %118 : vector<8x128xf32>
    %c0_16 = arith.constant 0 : index
    %120 = arith.index_cast %c7_i32 : i32 to index
    %121 = arith.index_cast %1 : i32 to index
    %c0_17 = arith.constant 0 : index
    %122 = vector.load %arg5[%c0_16, %120, %121, %c0_17] : memref<1x11x8x128xf32, #tpu.memory_space<vmem>>, vector<1x1x8x128xf32>
    %123 = vector.shape_cast %122 : vector<1x1x8x128xf32> to vector<8x128xf32>
    %124 = vector.shape_cast %119 : vector<8x128xf32> to vector<1x1x8x128xf32>
    tpu.vector_store %arg5[%c0_16, %120, %121, %c0_17], %124 {strides = array<i32>} : memref<1x11x8x128xf32, #tpu.memory_space<vmem>>, vector<1x1x8x128xf32>,
    %c8_i32_18 = arith.constant 8 : i32
    %125 = arith.index_cast %c8_i32_18 : i32 to index
    %126 = memref.load %arg2[%125] : memref<11xf32, #tpu.memory_space<smem>>
    %127 = vector.broadcast %126 : f32 to vector<8x128xf32>
    %128 = arith.subf %4, %127 : vector<8x128xf32>
    %129 = arith.mulf %128, %128 : vector<8x128xf32>
    %130 = arith.index_cast %c8_i32_18 : i32 to index
    %131 = memref.load %arg3[%130] : memref<11xf32, #tpu.memory_space<smem>>
    %132 = vector.broadcast %131 : f32 to vector<8x128xf32>
    %133 = arith.mulf %129, %132 : vector<8x128xf32>
    %134 = math.exp %133 : vector<8x128xf32>
    %c0_19 = arith.constant 0 : index
    %135 = arith.index_cast %c8_i32_18 : i32 to index
    %136 = arith.index_cast %1 : i32 to index
    %c0_20 = arith.constant 0 : index
    %137 = vector.load %arg5[%c0_19, %135, %136, %c0_20] : memref<1x11x8x128xf32, #tpu.memory_space<vmem>>, vector<1x1x8x128xf32>
    %138 = vector.shape_cast %137 : vector<1x1x8x128xf32> to vector<8x128xf32>
    %139 = vector.shape_cast %134 : vector<8x128xf32> to vector<1x1x8x128xf32>
    tpu.vector_store %arg5[%c0_19, %135, %136, %c0_20], %139 {strides = array<i32>} : memref<1x11x8x128xf32, #tpu.memory_space<vmem>>, vector<1x1x8x128xf32>,
    %c9_i32 = arith.constant 9 : i32
    %140 = arith.index_cast %c9_i32 : i32 to index
    %141 = memref.load %arg2[%140] : memref<11xf32, #tpu.memory_space<smem>>
    %142 = vector.broadcast %141 : f32 to vector<8x128xf32>
    %143 = arith.subf %4, %142 : vector<8x128xf32>
    %144 = arith.mulf %143, %143 : vector<8x128xf32>
    %145 = arith.index_cast %c9_i32 : i32 to index
    %146 = memref.load %arg3[%145] : memref<11xf32, #tpu.memory_space<smem>>
    %147 = vector.broadcast %146 : f32 to vector<8x128xf32>
    %148 = arith.mulf %144, %147 : vector<8x128xf32>
    %149 = math.exp %148 : vector<8x128xf32>
    %c0_21 = arith.constant 0 : index
    %150 = arith.index_cast %c9_i32 : i32 to index
    %151 = arith.index_cast %1 : i32 to index
    %c0_22 = arith.constant 0 : index
    %152 = vector.load %arg5[%c0_21, %150, %151, %c0_22] : memref<1x11x8x128xf32, #tpu.memory_space<vmem>>, vector<1x1x8x128xf32>
    %153 = vector.shape_cast %152 : vector<1x1x8x128xf32> to vector<8x128xf32>
    %154 = vector.shape_cast %149 : vector<8x128xf32> to vector<1x1x8x128xf32>
    tpu.vector_store %arg5[%c0_21, %150, %151, %c0_22], %154 {strides = array<i32>} : memref<1x11x8x128xf32, #tpu.memory_space<vmem>>, vector<1x1x8x128xf32>,
    %c10_i32 = arith.constant 10 : i32
    %155 = arith.index_cast %c10_i32 : i32 to index
    %156 = memref.load %arg2[%155] : memref<11xf32, #tpu.memory_space<smem>>
    %157 = vector.broadcast %156 : f32 to vector<8x128xf32>
    %158 = arith.subf %4, %157 : vector<8x128xf32>
    %159 = arith.mulf %158, %158 : vector<8x128xf32>
    %160 = arith.index_cast %c10_i32 : i32 to index
    %161 = memref.load %arg3[%160] : memref<11xf32, #tpu.memory_space<smem>>
    %162 = vector.broadcast %161 : f32 to vector<8x128xf32>
    %163 = arith.mulf %159, %162 : vector<8x128xf32>
    %164 = math.exp %163 : vector<8x128xf32>
    %c0_23 = arith.constant 0 : index
    %165 = arith.index_cast %c10_i32 : i32 to index
    %166 = arith.index_cast %1 : i32 to index
    %c0_24 = arith.constant 0 : index
    %167 = vector.load %arg5[%c0_23, %165, %166, %c0_24] : memref<1x11x8x128xf32, #tpu.memory_space<vmem>>, vector<1x1x8x128xf32>
    %168 = vector.shape_cast %167 : vector<1x1x8x128xf32> to vector<8x128xf32>
    %169 = vector.shape_cast %164 : vector<8x128xf32> to vector<1x1x8x128xf32>
    tpu.vector_store %arg5[%c0_23, %165, %166, %c0_24], %169 {strides = array<i32>} : memref<1x11x8x128xf32, #tpu.memory_space<vmem>>, vector<1x1x8x128xf32>,
    %c11_i32 = arith.constant 11 : i32
    %c1_i32_25 = arith.constant 1 : i32
    return
  }
  func.func @transform_0(%arg0: i32, %arg1: i32) -> i32 {
    %c0_i32 = arith.constant 0 : i32
    %c0_i32_0 = arith.constant 0 : i32
    return %c0_i32 : i32
  }
  func.func @transform_1(%arg0: i32, %arg1: i32) -> i32 {
    %c0_i32 = arith.constant 0 : i32
    %c0_i32_0 = arith.constant 0 : i32
    return %c0_i32 : i32
  }
  func.func @transform_2(%arg0: i32, %arg1: i32) -> (i32, i32, i32) {
    %c0_i32 = arith.constant 0 : i32
    %c0_i32_0 = arith.constant 0 : i32
    return %arg0, %arg1, %c0_i32 : i32, i32, i32
  }
  func.func @transform_3(%arg0: i32, %arg1: i32) -> (i32, i32, i32, i32) {
    %c0_i32 = arith.constant 0 : i32
    %c0_i32_0 = arith.constant 0 : i32
    %c0_i32_1 = arith.constant 0 : i32
    return %arg0, %c0_i32, %arg1, %c0_i32_0 : i32, i32, i32, i32
  }
}

</mosaic_0001>

<llo_original>
// kernel: tpu_custom_call.1
$region0: #{tpu_custom_call.1}
  #allocation0 [shape = 'u32[]', space=smem, size = 0x4, offset = 0x4, fixed_abs, tag = 'smem constant byte address 0x4 - core index']
  #allocation1 [shape = 'u32[144,128]{1,0:T(1,128)}', space=vmem, size = 0x12000, scoped, tag = 'internal scratch']
  %s0 = inlined_call_operand.hbm [shape: f32[11], index: 0, kind: input, shape index: {}]
  %s1 = inlined_call_operand.vmem [shape: f32[11], index: 1, kind: input, shape index: {}]
  %s2 = inlined_call_operand.hbm [shape: f32[2,8,128], index: 2, kind: input, shape index: {}]
  %s3 = inlined_call_operand.hbm [shape: f32[2,11,8,128], index: 3, kind: output, shape index: {}]
  %s4 = sld [smem:[#allocation0]]
  $region57: #{tpu_custom_call.1} parent=0
    _
  %s6 = ssub.s32 1, %s4
  %s7 = scalar_select 0, %s6, %s4
  $region1: #{tpu_custom_call.1} parent=0
    #allocation2 [shape = 'u8[512]{0}', space=smem, size = 0x200, scoped, tag = 'input window, operand 0, single buffered']
    #allocation3 [shape = 's32[2]{0}', space=sflag, size = 0x8, scoped, tag = 'scoped memory for tpu_custom_call.1']
    #allocation4 [shape = 's32[2]{0}', space=sflag, size = 0x8, scoped, tag = 'scoped memory for tpu_custom_call.1']
    #allocation5 [shape = 's32[2]{0}', space=sflag, size = 0x8, scoped, tag = 'scoped memory for tpu_custom_call.1']
    #allocation6 [shape = 's32[2]{0}', space=sflag, size = 0x8, scoped, tag = 'scoped memory for tpu_custom_call.1']
    #allocation7 [shape = 'u8[512]{0}', space=smem, size = 0x200, scoped, tag = 'input window, operand 1, single buffered']
    #allocation8 [shape = 'u8[8192]{0}', space=vmem, size = 0x2000, scoped, tag = 'input window, operand 2']
    #allocation9 [shape = 'u8[90112]{0}', space=vmem, size = 0x16000, scoped, tag = 'output window, operand 0']
    %8 = vsyncpa [#allocation5], 0
    %9 = vsyncpa [#allocation6], 0
    %10 = vsyncpa [#allocation3], 0
    %s11 = scalar_lea.sflag [#allocation3], 1
    %12 = vsyncpa %s11, 0
    %13 = vsyncpa [#allocation4], 0
    %s14 = scalar_lea.sflag [#allocation4], 1
    %15 = vsyncpa %s14, 0
    loop: start=0, step=1, limit=4
    $region2: #{tpu_custom_call.1} parent=1 // loop_pre_header
      _
    $region3: #{tpu_custom_call.1} parent=1 // loop_header
      %s17 = sphi 0, %s21
      %p18 = scmp.ge.s32.totalorder %s17, 4
      %s24 = sphi 0, %s36
      %s25 = sphi 0, %s32
      %s26 = sphi 0, %s24
      %s27 = sphi 0, %s25
      %s28 = sphi 0, %s26
      %s29 = sphi 0, %s27
      %s37 = sphi 0, %s37
      %s39 = sphi 0, %s37
      %s40 = sphi 0, %s39
      %s54 = sphi 0, %s40
      %s58 = sphi 0, %s58
      %s60 = sphi 0, %s58
      %s61 = sphi 0, %s60
      %s75 = sphi 0, %s61
      %s83 = sphi 0, %s85
      %s86 = sphi 0, %s83
      %s87 = sphi 0, %s86
      %s103 = sphi 0, %s87
      %s111 = sphi 0, %s113
      %s114 = sphi 0, %s111
      %s115 = sphi 0, %s114
      %s131 = sphi 0, %s115
    $region4: #{tpu_custom_call.1} parent=1 // loop_header_branch
      %20 = sbr.rel (%p18) target = $region8
    $region5: #{tpu_custom_call.1} parent=1 // loop_body
      %s22 = ssub.s32 %s17, 1
      %s23 = ssub.s32 %s17, 2
      %s30 = sadd.s32 1, %s25
      %p31 = scmp.ge.s32.totalorder %s30, 1
      %s32 = scalar_select %p31, 0, %s30
      %s33 = sadd.s32 1, %s24
      %s34 = scalar_select %p31, %s33, %s24
      %p35 = scmp.ge.s32.totalorder %s34, 2
      %s36 = scalar_select %p35, 0, %s34
      %s38 = sadd.s32 %s37, 1
      %p41 = scmp.eq.s32.totalorder %s17, 1
      %p42 = scmp.ne.s32.totalorder %s37, %s39
      %p43 = scmp.eq.s32.totalorder %s17, 0
      %p44 = por %p42, %p43
      %p45 = scmp.ne.s32.totalorder %s37, %s39
      %p46 = scmp.eq.s32.totalorder %s22, 1
      %p47 = por %p45, %p46
      %p48 = scmp.ne.s32.totalorder %s39, %s40
      %p49 = scmp.eq.s32.totalorder %s22, 0
      %p50 = por %p48, %p49
      %p51 = scmp.ne.s32.totalorder %s39, %s40
      %p52 = scmp.eq.s32.totalorder %s23, 1
      %p53 = por %p51, %p52
      %p55 = scmp.ne.s32.totalorder %s40, %s54
      %p56 = scmp.eq.s32.totalorder %s23, 0
      %p57 = por %p55, %p56
      %s59 = sadd.s32 %s58, 1
      %p62 = scmp.eq.s32.totalorder %s17, 1
      %p63 = scmp.ne.s32.totalorder %s58, %s60
      %p64 = scmp.eq.s32.totalorder %s17, 0
      %p65 = por %p63, %p64
      %p66 = scmp.ne.s32.totalorder %s58, %s60
      %p67 = scmp.eq.s32.totalorder %s22, 1
      %p68 = por %p66, %p67
      %p69 = scmp.ne.s32.totalorder %s60, %s61
      %p70 = scmp.eq.s32.totalorder %s22, 0
      %p71 = por %p69, %p70
      %p72 = scmp.ne.s32.totalorder %s60, %s61
      %p73 = scmp.eq.s32.totalorder %s23, 1
      %p74 = por %p72, %p73
      %p76 = scmp.ne.s32.totalorder %s61, %s75
      %p77 = scmp.eq.s32.totalorder %s23, 0
      %p78 = por %p76, %p77
      %s79 = ssub.s32 %s24, %s36
      %s80 = ssub.s32 %s25, %s32
      %s81 = sor.u32 %s79, %s80
      %p82 = scmp.eq.s32.totalorder %s81, 0
      %s84 = sadd.s32 %s83, 1
      %s85 = scalar_select %p82, %s83, %s84
      %p88 = pneg %p82
      %p89 = scmp.eq.s32.totalorder %s17, 1
      %p90 = por %p88, %p89
      %p91 = scmp.ne.s32.totalorder %s83, %s86
      %p92 = scmp.eq.s32.totalorder %s17, 0
      %p93 = por %p91, %p92
      %p94 = scmp.ne.s32.totalorder %s83, %s86
      %p95 = scmp.eq.s32.totalorder %s22, 1
      %p96 = por %p94, %p95
      %p97 = scmp.ne.s32.totalorder %s86, %s87
      %p98 = scmp.eq.s32.totalorder %s22, 0
      %p99 = por %p97, %p98
      %p100 = scmp.ne.s32.totalorder %s86, %s87
      %p101 = scmp.eq.s32.totalorder %s23, 1
      %p102 = por %p100, %p101
      %p104 = scmp.ne.s32.totalorder %s87, %s103
      %p105 = scmp.eq.s32.totalorder %s23, 0
      %p106 = por %p104, %p105
      %s107 = ssub.s32 %s24, %s36
      %s108 = ssub.s32 %s25, %s32
      %s109 = sor.u32 %s107, %s108
      %p110 = scmp.eq.s32.totalorder %s109, 0
      %s112 = sadd.s32 %s111, 1
      %s113 = scalar_select %p110, %s111, %s112
      %p116 = pneg %p110
      %p117 = scmp.eq.s32.totalorder %s17, 1
      %p118 = por %p116, %p117
      %p119 = scmp.ne.s32.totalorder %s111, %s114
      %p120 = scmp.eq.s32.totalorder %s17, 0
      %p121 = por %p119, %p120
      %p122 = scmp.ne.s32.totalorder %s111, %s114
      %p123 = scmp.eq.s32.totalorder %s22, 1
      %p124 = por %p122, %p123
      %p125 = scmp.ne.s32.totalorder %s114, %s115
      %p126 = scmp.eq.s32.totalorder %s22, 0
      %p127 = por %p125, %p126
      %p128 = scmp.ne.s32.totalorder %s114, %s115
      %p129 = scmp.eq.s32.totalorder %s23, 1
      %p130 = por %p128, %p129
      %p132 = scmp.ne.s32.totalorder %s115, %s131
      %p133 = scmp.eq.s32.totalorder %s23, 0
      %p134 = por %p132, %p133
      %p135 = scmp.le.s32.totalorder 1, %s17
      %p136 = scmp.lt.s32.totalorder %s17, 3
      %p137 = pnand %p135, %p136
      %p138 = pneg %p137
      // Predicated region
      $region9: #{tpu_custom_call.1} parent=5 // pred_check
        _
      $region10: #{tpu_custom_call.1} parent=5 // pred_check_branch
        %140 = sbr.rel (%p137) target = $region12
      $region11: #{tpu_custom_call.1} parent=5 // pred_region
        %s141 = ssub.s32 %s17, 1
        // Predicated region
        $region13: #{tpu_custom_call.1} parent=11 // pred_check
          %p142 = pneg %p50
        $region14: #{tpu_custom_call.1} parent=11 // pred_check_branch
          %144 = sbr.rel (%p142) target = $region16
        $region15: #{tpu_custom_call.1} parent=11 // pred_region
          %s146 = ssub.s32 16, 16
          %147 = vsyncadd [#allocation5], %s146
          %150 = dma.hbm_to_smem %s0, 16, [#allocation2], [#allocation5]
        $region16: #{tpu_custom_call.1} parent=11 // pred_fallthru
          _
        // Predicated region
        $region17: #{tpu_custom_call.1} parent=11 // pred_check
          %p151 = pneg %p71
        $region18: #{tpu_custom_call.1} parent=11 // pred_check_branch
          %153 = sbr.rel (%p151) target = $region20
        $region19: #{tpu_custom_call.1} parent=11 // pred_region
          %s155 = ssub.s32 16, 16
          %156 = vsyncadd [#allocation6], %s155
          %s158 = sshll.u32 %s1, 4
          %s159 = int_to_ptr.vmem [resolvable:$true] %s158
          %161 = dma.vmem_to_smem %s159, 16, [#allocation7], [#allocation6]
        $region20: #{tpu_custom_call.1} parent=11 // pred_fallthru
          _
      $region12: #{tpu_custom_call.1} parent=5 // pred_fallthru
        _
      %p162 = scmp.lt.s32.totalorder %s17, 2
      // Predicated region
      $region21: #{tpu_custom_call.1} parent=5 // pred_check
        %p163 = pneg %p162
      $region22: #{tpu_custom_call.1} parent=5 // pred_check_branch
        %165 = sbr.rel (%p163) target = $region24
      $region23: #{tpu_custom_call.1} parent=5 // pred_region
        // Predicated region
        $region25: #{tpu_custom_call.1} parent=23 // pred_check
          %p166 = pneg %p93
        $region26: #{tpu_custom_call.1} parent=23 // pred_check_branch
          %168 = sbr.rel (%p166) target = $region28
        $region27: #{tpu_custom_call.1} parent=23 // pred_region
          %s169 = sand.u32 %s83, 1
          %s170 = scalar_lea.sflag [#allocation3], %s169
          %s171 = sand.u32 %s83, 1
          %s172 = smul.addr %s171, 8
          %s173 = scalar_lea.vmem [#allocation8], %s172
          %s175 = ssub.s32 128, 128
          %176 = vsyncadd %s170, %s175
          %s177 = sadd.s32 %s25, %s24
          %s178 = smul.addr %s177, 128
          %s179 = scalar_lea.hbm %s2, %s178
          %s181 = sshll.u32 %s173, 4
          %s182 = int_to_ptr.vmem [resolvable:$true] %s181
          %184 = dma.hbm_to_vmem [thread:$0]  %s179, 128, %s182, %s170
        $region28: #{tpu_custom_call.1} parent=23 // pred_fallthru
          _
      $region24: #{tpu_custom_call.1} parent=5 // pred_fallthru
        _
      %p185 = scmp.le.s32.totalorder 1, %s17
      %p186 = scmp.lt.s32.totalorder %s17, 3
      %p187 = pnand %p185, %p186
      %p188 = pneg %p187
      // Predicated region
      $region29: #{tpu_custom_call.1} parent=5 // pred_check
        _
      $region30: #{tpu_custom_call.1} parent=5 // pred_check_branch
        %190 = sbr.rel (%p187) target = $region32
      $region31: #{tpu_custom_call.1} parent=5 // pred_region
        %s191 = ssub.s32 %s17, 1
        // Predicated region
        $region33: #{tpu_custom_call.1} parent=31 // pred_check
          %p192 = pneg %p50
        $region34: #{tpu_custom_call.1} parent=31 // pred_check_branch
          %194 = sbr.rel (%p192) target = $region36
        $region35: #{tpu_custom_call.1} parent=31 // pred_region
          %195 = dma.done [#allocation5], 16
        $region36: #{tpu_custom_call.1} parent=31 // pred_fallthru
          _
        // Predicated region
        $region37: #{tpu_custom_call.1} parent=31 // pred_check
          %p196 = pneg %p71
        $region38: #{tpu_custom_call.1} parent=31 // pred_check_branch
          %198 = sbr.rel (%p196) target = $region40
        $region39: #{tpu_custom_call.1} parent=31 // pred_region
          %199 = dma.done [#allocation6], 16
        $region40: #{tpu_custom_call.1} parent=31 // pred_fallthru
          _
        %s200 = sand.u32 %s86, 1
        %s201 = scalar_lea.sflag [#allocation3], %s200
        %s202 = sand.u32 %s86, 1
        %s203 = smul.addr %s202, 8
        %s204 = scalar_lea.vmem [#allocation8], %s203
        // Predicated region
        $region41: #{tpu_custom_call.1} parent=31 // pred_check
          %p205 = pneg %p99
        $region42: #{tpu_custom_call.1} parent=31 // pred_check_branch
          %207 = sbr.rel (%p205) target = $region44
        $region43: #{tpu_custom_call.1} parent=31 // pred_region
          %208 = dma.done %s201, 128
        $region44: #{tpu_custom_call.1} parent=31 // pred_fallthru
          _
        %209 = sfence
        %p210 = pneg %p50
        %p211 = pneg %p47
        %p212 = pneg %p71
        %p213 = pneg %p68
        %s214 = sand.u32 %s86, 1
        %s215 = scalar_lea.sflag [#allocation3], %s214
        %s216 = sand.u32 %s86, 1
        %s217 = smul.addr %s216, 8
        %s218 = scalar_lea.vmem [#allocation8], %s217
        %p219 = pneg %p99
        %p220 = pneg %p96
        %p221 = pneg %p127
        %p222 = pneg %p124
        %s223 = sand.u32 %s114, 1
        %s224 = scalar_lea.sflag [#allocation4], %s223
        %s225 = sand.u32 %s114, 1
        %s226 = smul.addr %s225, 88
        %s227 = scalar_lea.vmem [#allocation9], %s226
        %v228 = vld [vmem:[%s204] sm:$0xff]
        %s229 = sld [smem:[#allocation2]]
        %v230 = vstv %s229
        %v231 = vsub.f32 %v228, %v230
        %v232 = vmul.f32 %v231, %v231
        %s233 = sld [smem:[#allocation7]]
        %v234 = vstv %s233
        %v235 = vmul.f32 %v232, %v234
        %v236 = vmul.f32 %v235, 1.442695
        %v237 = vpow.pop %v236
        %238 = vst [vmem:[%s227] sm:$0xff] %v237
        %s239 = sld [smem:[#allocation2 + $0x1]]
        %v240 = vstv %s239
        %v241 = vsub.f32 %v228, %v240
        %v242 = vmul.f32 %v241, %v241
        %s243 = sld [smem:[#allocation7 + $0x1]]
        %v244 = vstv %s243
        %v245 = vmul.f32 %v242, %v244
        %v246 = vmul.f32 %v245, 1.442695
        %v247 = vpow.pop %v246
        %s248 = sadd.s32 0, 8
        %s249 = scalar_lea.vmem %s227, %s248 [#allocation9]
        %250 = vst [vmem:[%s249] sm:$0xff] %v247
        %s251 = sld [smem:[#allocation2 + $0x2]]
        %v252 = vstv %s251
        %v253 = vsub.f32 %v228, %v252
        %v254 = vmul.f32 %v253, %v253
        %s255 = sld [smem:[#allocation7 + $0x2]]
        %v256 = vstv %s255
        %v257 = vmul.f32 %v254, %v256
        %v258 = vmul.f32 %v257, 1.442695
        %v259 = vpow.pop %v258
        %s260 = sadd.s32 0, 16
        %s261 = scalar_lea.vmem %s227, %s260 [#allocation9]
        %262 = vst [vmem:[%s261] sm:$0xff] %v259
        %s263 = sld [smem:[#allocation2 + $0x3]]
        %v264 = vstv %s263
        %v265 = vsub.f32 %v228, %v264
        %v266 = vmul.f32 %v265, %v265
        %s267 = sld [smem:[#allocation7 + $0x3]]
        %v268 = vstv %s267
        %v269 = vmul.f32 %v266, %v268
        %v270 = vmul.f32 %v269, 1.442695
        %v271 = vpow.pop %v270
        %s272 = sadd.s32 0, 24
        %s273 = scalar_lea.vmem %s227, %s272 [#allocation9]
        %274 = vst [vmem:[%s273] sm:$0xff] %v271
        %s275 = sld [smem:[#allocation2 + $0x4]]
        %v276 = vstv %s275
        %v277 = vsub.f32 %v228, %v276
        %v278 = vmul.f32 %v277, %v277
        %s279 = sld [smem:[#allocation7 + $0x4]]
        %v280 = vstv %s279
        %v281 = vmul.f32 %v278, %v280
        %v282 = vmul.f32 %v281, 1.442695
        %v283 = vpow.pop %v282
        %s284 = sadd.s32 0, 32
        %s285 = scalar_lea.vmem %s227, %s284 [#allocation9]
        %286 = vst [vmem:[%s285] sm:$0xff] %v283
        %s287 = sld [smem:[#allocation2 + $0x5]]
        %v288 = vstv %s287
        %v289 = vsub.f32 %v228, %v288
        %v290 = vmul.f32 %v289, %v289
        %s291 = sld [smem:[#allocation7 + $0x5]]
        %v292 = vstv %s291
        %v293 = vmul.f32 %v290, %v292
        %v294 = vmul.f32 %v293, 1.442695
        %v295 = vpow.pop %v294
        %s296 = sadd.s32 0, 40
        %s297 = scalar_lea.vmem %s227, %s296 [#allocation9]
        %298 = vst [vmem:[%s297] sm:$0xff] %v295
        %s299 = sld [smem:[#allocation2 + $0x6]]
        %v300 = vstv %s299
        %v301 = vsub.f32 %v228, %v300
        %v302 = vmul.f32 %v301, %v301
        %s303 = sld [smem:[#allocation7 + $0x6]]
        %v304 = vstv %s303
        %v305 = vmul.f32 %v302, %v304
        %v306 = vmul.f32 %v305, 1.442695
        %v307 = vpow.pop %v306
        %s308 = sadd.s32 0, 48
        %s309 = scalar_lea.vmem %s227, %s308 [#allocation9]
        %310 = vst [vmem:[%s309] sm:$0xff] %v307
        %s311 = sld [smem:[#allocation2 + $0x7]]
        %v312 = vstv %s311
        %v313 = vsub.f32 %v228, %v312
        %v314 = vmul.f32 %v313, %v313
        %s315 = sld [smem:[#allocation7 + $0x7]]
        %v316 = vstv %s315
        %v317 = vmul.f32 %v314, %v316
        %v318 = vmul.f32 %v317, 1.442695
        %v319 = vpow.pop %v318
        %s320 = sadd.s32 0, 56
        %s321 = scalar_lea.vmem %s227, %s320 [#allocation9]
        %322 = vst [vmem:[%s321] sm:$0xff] %v319
        %s323 = sld [smem:[#allocation2 + $0x8]]
        %v324 = vstv %s323
        %v325 = vsub.f32 %v228, %v324
        %v326 = vmul.f32 %v325, %v325
        %s327 = sld [smem:[#allocation7 + $0x8]]
        %v328 = vstv %s327
        %v329 = vmul.f32 %v326, %v328
        %v330 = vmul.f32 %v329, 1.442695
        %v331 = vpow.pop %v330
        %s332 = sadd.s32 0, 64
        %s333 = scalar_lea.vmem %s227, %s332 [#allocation9]
        %334 = vst [vmem:[%s333] sm:$0xff] %v331
        %s335 = sld [smem:[#allocation2 + $0x9]]
        %v336 = vstv %s335
        %v337 = vsub.f32 %v228, %v336
        %v338 = vmul.f32 %v337, %v337
        %s339 = sld [smem:[#allocation7 + $0x9]]
        %v340 = vstv %s339
        %v341 = vmul.f32 %v338, %v340
        %v342 = vmul.f32 %v341, 1.442695
        %v343 = vpow.pop %v342
        %s344 = sadd.s32 0, 72
        %s345 = scalar_lea.vmem %s227, %s344 [#allocation9]
        %346 = vst [vmem:[%s345] sm:$0xff] %v343
        %s347 = sld [smem:[#allocation2 + $0xa]]
        %v348 = vstv %s347
        %v349 = vsub.f32 %v228, %v348
        %v350 = vmul.f32 %v349, %v349
        %s351 = sld [smem:[#allocation7 + $0xa]]
        %v352 = vstv %s351
        %v353 = vmul.f32 %v350, %v352
        %v354 = vmul.f32 %v353, 1.442695
        %v355 = vpow.pop %v354
        %s356 = sadd.s32 0, 80
        %s357 = scalar_lea.vmem %s227, %s356 [#allocation9]
        %358 = vst [vmem:[%s357] sm:$0xff] %v355
        %s359 = sand.u32 %s114, 1
        %s360 = scalar_lea.sflag [#allocation4], %s359
        %s361 = sand.u32 %s114, 1
        %s362 = smul.addr %s361, 88
        %s363 = scalar_lea.vmem [#allocation9], %s362
        // Predicated region
        $region45: #{tpu_custom_call.1} parent=31 // pred_check
          %p364 = pneg %p124
        $region46: #{tpu_custom_call.1} parent=31 // pred_check_branch
          %366 = sbr.rel (%p364) target = $region48
        $region47: #{tpu_custom_call.1} parent=31 // pred_region
          %s368 = ssub.s32 1408, 1408
          %369 = vsyncadd %s360, %s368
          %s370 = smul.addr %s26, 11
          %s371 = sadd.s32 %s27, %s370
          %s372 = smul.addr %s371, 128
          %s373 = scalar_lea.hbm %s3, %s372
          %s374 = sshll.u32 %s363, 4
          %s375 = int_to_ptr.vmem [resolvable:$true] %s374
          %380 = dma.vmem_to_hbm [thread:$0]  %s375, 1408, %s373, %s360, 128, 128, 8
        $region48: #{tpu_custom_call.1} parent=31 // pred_fallthru
          _
      $region32: #{tpu_custom_call.1} parent=5 // pred_fallthru
        _
      %p381 = scmp.le.s32.totalorder 2, %s17
      // Predicated region
      $region49: #{tpu_custom_call.1} parent=5 // pred_check
        %p382 = pneg %p381
      $region50: #{tpu_custom_call.1} parent=5 // pred_check_branch
        %384 = sbr.rel (%p382) target = $region52
      $region51: #{tpu_custom_call.1} parent=5 // pred_region
        %s385 = ssub.s32 %s17, 2
        // Predicated region
        $region53: #{tpu_custom_call.1} parent=51 // pred_check
          %p386 = pneg %p130
        $region54: #{tpu_custom_call.1} parent=51 // pred_check_branch
          %388 = sbr.rel (%p386) target = $region56
        $region55: #{tpu_custom_call.1} parent=51 // pred_region
          %s389 = sand.u32 %s115, 1
          %s390 = scalar_lea.sflag [#allocation4], %s389
          %s391 = sand.u32 %s115, 1
          %s392 = smul.addr %s391, 88
          %s393 = scalar_lea.vmem [#allocation9], %s392
          %394 = dma.done %s390, 1408
        $region56: #{tpu_custom_call.1} parent=51 // pred_fallthru
          _
      $region52: #{tpu_custom_call.1} parent=5 // pred_fallthru
        _
    $region6: #{tpu_custom_call.1} parent=1 // loop_footer
      %s21 = sadd.s32 1, %s17
    $region7: #{tpu_custom_call.1} parent=1 // loop_footer_branch
      %16 = sbr.rel target = $region3
    $region8: #{tpu_custom_call.1} parent=1 // loop_exit
      _
    %395 = vsyncpa [#allocation3], 1
    %s396 = scalar_lea.sflag [#allocation3], 1
    %397 = vsyncpa %s396, 1
    %398 = vsyncpa [#allocation4], 1
    %s399 = scalar_lea.sflag [#allocation4], 1
    %400 = vsyncpa %s399, 1
    %401 = vsyncpa [#allocation5], 1
    %s402 = scalar_lea.sflag [#allocation5], 1
    %403 = vsyncpa %s402, 1
    %404 = vsyncpa [#allocation6], 1
    %s405 = scalar_lea.sflag [#allocation6], 1
    %406 = vsyncpa %s405, 1

</llo_original>
